<compile_context>
chip_gen: v7x
topology: tpu7x:2x2x1
jax: 0.10.0
libtpu: 0.0.40
codegen_flags: <defaults>
</compile_context>

<pallas_src>
import functools

import jax
import jax.numpy as jnp
from jax import lax
from jax.experimental import pallas as pl
from jax.experimental.pallas import tpu as pltpu


def _round_up(a, b):
    return ((a + b - 1) // b) * b


def _linear_kernel(x_ref, w_ref, o_ref, *, normalize, use_bf16):
    """One (tm, N) output stripe, accumulated over the K grid axis.

    x_ref: (tm, tk)  activation tile
    w_ref: (tn, tk)  weight tile in nn.Linear layout (embed_dim, in_dim)
    o_ref: (tm, tn)  f32 output tile, used directly as the accumulator
    """
    k = pl.program_id(1)

    @pl.when(k == 0)
    def _():
        o_ref[...] = jnp.zeros_like(o_ref)

    x = x_ref[...]
    w = w_ref[...]
    if use_bf16:
        # bf16 MXU inputs, f32 accumulation (v5e/v6e fast path).
        x = x.astype(jnp.bfloat16)
        w = w.astype(jnp.bfloat16)

    # Contract over in_dim (axis 1 of both operands): x @ W.T without ever
    # materializing W.T on the host.
    o_ref[...] += lax.dot_general(
        x, w,
        dimension_numbers=(((1,), (1,)), ((), ())),
        preferred_element_type=jnp.float32,
    )

    @pl.when(k == pl.num_programs(1) - 1)
    def _():
        if normalize:
            acc = o_ref[...]
            sumsq = jnp.sum(acc * acc, axis=-1, keepdims=True)
            # F.normalize(dim=-1, eps=1e-12): x / max(||x||, eps)
            #   == x * min(rsqrt(sumsq), 1/eps).  rsqrt runs on the EUP slot
            #   instead of burning VALU slots on a full-tile divide.
            inv = jnp.minimum(lax.rsqrt(sumsq), 1e12)
            o_ref[...] = acc * inv


def linear_for_orig(x, weight, *, normalize=False, use_bf16_matmul=False):
    """Pallas equivalent of LinearforOrig.forward.

    x:      (B, in_dim)         float32
    weight: (embed_dim, in_dim) float32  (nn.Linear convention, bias=False)
    returns (B, embed_dim)
    """
    B, K = x.shape
    N, K2 = weight.shape
    assert K == K2, "in_dim mismatch"

    # ---- tile plan ------------------------------------------------------
    # Rows: fill the MXU (128) when the batch allows; else one padded stripe.
    if B <= 128:
        Bp = _round_up(B, 8)
        tm = Bp
    else:
        tm = 128
        Bp = _round_up(B, tm)

    # Normalization reduces over the full embed_dim, so keep all of N in one
    # lane-dense tile (multiple of 128).
    # TODO(synk): for very large embed_dim (>=16K) switch to a two-pass
    # normalize so N can be tiled and the weight slab fits v7x's 64 MiB VMEM.
    Np = _round_up(N, 128)
    tn = Np

    # K tiling: make the whole (padded) weight VMEM-resident when it fits the
    # budget (single k step, weight DMA'd once, only x streams); otherwise the
    # largest 128-multiple tk <= 1024 that fits.
    vmem_budget = 40 * 1024 * 1024  # conservative for v7x's 64 MiB physical

    def plan_bytes(tk_):
        # double-buffered x + double-buffered weight + resident f32 output
        return 4 * (2 * tm * tk_ + 2 * tn * tk_ + 2 * tm * tn)

    Kp = _round_up(K, 128)
    if plan_bytes(Kp) <= vmem_budget:
        tk = Kp
    else:
        tk = 1024
        while tk > 128 and plan_bytes(tk) > vmem_budget:
            tk -= 128
        Kp = _round_up(K, tk)

    # ---- pad only when needed (skip extra HBM passes on aligned shapes) --
    if (Bp, Kp) != (B, K):
        x_p = jnp.zeros((Bp, Kp), x.dtype).at[:B, :K].set(x)
    else:
        x_p = x
    if (Np, Kp) != (N, K):
        w_p = jnp.zeros((Np, Kp), weight.dtype).at[:N, :K].set(weight)
    else:
        w_p = weight

    kernel = functools.partial(
        _linear_kernel, normalize=normalize, use_bf16=use_bf16_matmul)

    vmem_limit = int(min(48 * 1024 * 1024,
                         max(32 * 1024 * 1024, plan_bytes(tk) + (8 << 20))))

    out_p = pl.pallas_call(
        kernel,
        out_shape=jax.ShapeDtypeStruct((Bp, Np), jnp.float32),
        grid_spec=pltpu.PrefetchScalarGridSpec(
            num_scalar_prefetch=0,
            grid=(Bp // tm, Kp // tk),
            in_specs=[
                pl.BlockSpec((tm, tk), lambda i, k: (i, k)),
                # Weight block index is constant in i (and in k when tk == Kp),
                # so Pallas keeps it VMEM-resident instead of re-streaming it
                # from HBM for every row stripe.
                pl.BlockSpec((tn, tk), lambda i, k: (0, k)),
            ],
            out_specs=pl.BlockSpec((tm, tn), lambda i, k: (i, 0)),
        ),
        compiler_params=pltpu.CompilerParams(
            dimension_semantics=("parallel", "arbitrary"),
            vmem_limit_bytes=vmem_limit,
        ),
    )(x_p, w_p)

    # Padded N columns are all-zero so they never perturb the row norm; the
    # unpadded slice is exact.  Padded B rows are dropped here.
    return out_p[:B, :N].astype(x.dtype)


if __name__ == "__main__":
    key = jax.random.PRNGKey(0)
    kx, kw = jax.random.split(key)

    # Case 1: aligned small shapes (no padding path).
    batch, in_dim, embed_dim = 8, 128, 256
    text_emb = jax.random.normal(kx, (batch, in_dim), dtype=jnp.float32)
    weight = (jax.random.normal(kw, (embed_dim, in_dim), dtype=jnp.float32)
              / jnp.sqrt(in_dim))

    out = linear_for_orig(text_emb, weight, normalize=False)
    out_norm = linear_for_orig(text_emb, weight, normalize=True)
    jax.block_until_ready((out, out_norm))

    ref = text_emb @ weight.T
    ref_norm = ref / jnp.maximum(
        jnp.linalg.norm(ref, axis=-1, keepdims=True), 1e-12)
    assert jnp.allclose(out, ref, atol=1e-4, rtol=1e-4)
    assert jnp.allclose(out_norm, ref_norm, atol=1e-4, rtol=1e-4)

    # Case 2: unaligned shapes (module default in_dim=1000) -> padding path.
    b2, k2, n2 = 6, 1000, 200
    x2 = jax.random.normal(kx, (b2, k2), dtype=jnp.float32)
    w2 = jax.random.normal(kw, (n2, k2), dtype=jnp.float32) / jnp.sqrt(k2)
    out2 = linear_for_orig(x2, w2, normalize=True)
    jax.block_until_ready(out2)
    ref2 = x2 @ w2.T
    ref2 = ref2 / jnp.maximum(
        jnp.linalg.norm(ref2, axis=-1, keepdims=True), 1e-12)
    assert jnp.allclose(out2, ref2, atol=1e-2, rtol=1e-2)

    # Case 3: bf16-MXU fast path (f32 accumulation), looser tolerance.
    out_bf16 = linear_for_orig(text_emb, weight, normalize=True,
                               use_bf16_matmul=True)
    jax.block_until_ready(out_bf16)
    assert jnp.allclose(out_bf16, ref_norm, atol=5e-2, rtol=5e-2)

    print("KERNEL_OK")
</pallas_src>

<mosaic_0001>
module attributes {stable_mosaic.version = 11 : i64} {
  func.func @_linear_kernel(%arg0: i32, %arg1: i32, %arg2: memref<8x128xf32, #tpu.memory_space<vmem>>, %arg3: memref<256x128xf32, #tpu.memory_space<vmem>>, %arg4: memref<8x256xf32, #tpu.memory_space<vmem>>) attributes {dimension_semantics = [#tpu.dimension_semantics<parallel>, #tpu.dimension_semantics<arbitrary>], iteration_bounds = array<i64: 1, 1>, scalar_prefetch = 0 : i64, scratch_operands = 0 : i64, tpu.core_type = #tpu.core_type<tc>, window_params = [{transform_indices = @transform_0, window_bounds = array<i64: 8, 128>}, {transform_indices = @transform_1, window_bounds = array<i64: 256, 128>}, {transform_indices = @transform_2, window_bounds = array<i64: 8, 256>}]} {
    %c0_i32 = arith.constant 0 : i32
    %0 = arith.cmpi eq, %arg1, %c0_i32 : i32
    %1 = arith.extui %0 : i1 to i32
    %c0_i32_0 = arith.constant 0 : i32
    %2 = arith.cmpi ne, %1, %c0_i32_0 : i32
    scf.if %2 {
      %cst_8 = arith.constant 0.000000e+00 : f32
      %9 = vector.broadcast %cst_8 : f32 to vector<8x256xf32>
      %c0_9 = arith.constant 0 : index
      %c0_10 = arith.constant 0 : index
      %10 = vector.load %arg4[%c0_9, %c0_10] : memref<8x256xf32, #tpu.memory_space<vmem>>, vector<8x256xf32>
      tpu.vector_store %arg4[%c0_9, %c0_10], %9 {strides = array<i32>} : memref<8x256xf32, #tpu.memory_space<vmem>>, vector<8x256xf32>,
    } else {
    }
    %c0 = arith.constant 0 : index
    %c0_1 = arith.constant 0 : index
    %3 = vector.load %arg2[%c0, %c0_1] : memref<8x128xf32, #tpu.memory_space<vmem>>, vector<8x128xf32>
    %c0_2 = arith.constant 0 : index
    %c0_3 = arith.constant 0 : index
    %4 = vector.load %arg3[%c0_2, %c0_3] : memref<256x128xf32, #tpu.memory_space<vmem>>, vector<256x128xf32>
    %c0_4 = arith.constant 0 : index
    %c0_5 = arith.constant 0 : index
    %5 = vector.load %arg4[%c0_4, %c0_5] : memref<8x256xf32, #tpu.memory_space<vmem>>, vector<8x256xf32>
    %cst = arith.constant dense<0.000000e+00> : vector<8x256xf32>
    %6 = tpu.matmul %3, %4, %cst {dimension_numbers = #tpu.dot_dimension_numbers<[1], [1], [0], [0], [0, 0, 1, 0], [], []>} : vector<8x128xf32>, vector<256x128xf32>, vector<8x256xf32> -> vector<8x256xf32>
    %7 = arith.addf %5, %6 : vector<8x256xf32>
    %c0_6 = arith.constant 0 : index
    %c0_7 = arith.constant 0 : index
    %8 = vector.load %arg4[%c0_6, %c0_7] : memref<8x256xf32, #tpu.memory_space<vmem>>, vector<8x256xf32>
    tpu.vector_store %arg4[%c0_6, %c0_7], %7 {strides = array<i32>} : memref<8x256xf32, #tpu.memory_space<vmem>>, vector<8x256xf32>,
    return
  }
  func.func @transform_0(%arg0: i32, %arg1: i32) -> (i32, i32) {
    %c0_i32 = arith.constant 0 : i32
    return %arg0, %arg1 : i32, i32
  }
  func.func @transform_1(%arg0: i32, %arg1: i32) -> (i32, i32) {
    %c0_i32 = arith.constant 0 : i32
    %c0_i32_0 = arith.constant 0 : i32
    return %c0_i32, %arg1 : i32, i32
  }
  func.func @transform_2(%arg0: i32, %arg1: i32) -> (i32, i32) {
    %c0_i32 = arith.constant 0 : i32
    %c0_i32_0 = arith.constant 0 : i32
    return %arg0, %c0_i32 : i32, i32
  }
}

</mosaic_0001>

<llo_original>
// kernel: tpu_custom_call.1
$region0: #{tpu_custom_call.1}
  #allocation0 [shape = 'u32[]', space=smem, size = 0x4, offset = 0x4, fixed_abs, tag = 'smem constant byte address 0x4 - core index']
  #allocation1 [shape = 'u32[144,128]{1,0:T(1,128)}', space=vmem, size = 0x12000, scoped, tag = 'internal scratch']
  %s0 = inlined_call_operand.hbm [shape: f32[8,128], index: 0, kind: input, shape index: {}]
  %s1 = inlined_call_operand.hbm [shape: f32[256,128], index: 1, kind: input, shape index: {}]
  %s2 = inlined_call_operand.hbm [shape: f32[8,256], index: 2, kind: output, shape index: {}]
  %s3 = sld [smem:[#allocation0]]
  $region30: #{tpu_custom_call.1} parent=0
    _
  %s5 = ssub.s32 1, %s3
  %s6 = scalar_select 0, %s5, %s3
  $region1: #{tpu_custom_call.1} parent=0
    #allocation2 [shape = 'u8[4096]{0}', space=vmem, size = 0x1000, scoped, tag = 'input window, operand 0, single buffered']
    #allocation3 [shape = 's32[1]{0}', space=sflag, size = 0x4, scoped, tag = 'scoped memory for tpu_custom_call.1']
    #allocation4 [shape = 's32[1]{0}', space=sflag, size = 0x4, scoped, tag = 'scoped memory for tpu_custom_call.1']
    #allocation5 [shape = 'u8[131072]{0}', space=vmem, size = 0x20000, scoped, tag = 'input window, operand 1, single buffered']
    #allocation6 [shape = 's32[1]{0}', space=sflag, size = 0x4, scoped, tag = 'scoped memory for tpu_custom_call.1']
    #allocation7 [shape = 'u8[8192]{0}', space=vmem, size = 0x2000, scoped, tag = 'output window, operand 0, single buffered']
    %7 = vsyncpa [#allocation3], 0
    %8 = vsyncpa [#allocation6], 0
    %9 = vsyncpa [#allocation4], 0
    // Predicated region
    $region2: #{tpu_custom_call.1} parent=1 // pred_check
      _
    $region3: #{tpu_custom_call.1} parent=1 // pred_check_branch
      %11 = sbr.rel (0) target = $region5
    $region4: #{tpu_custom_call.1} parent=1 // pred_region
      %s13 = ssub.s32 128, 128
      %14 = vsyncadd [#allocation3], %s13
      %s16 = sshll.u32 [#allocation2], 4
      %s17 = int_to_ptr.vmem [resolvable:$true] %s16
      %19 = dma.hbm_to_vmem [thread:$0]  %s0, 128, %s17, [#allocation3]
    $region5: #{tpu_custom_call.1} parent=1 // pred_fallthru
      _
    // Predicated region
    $region6: #{tpu_custom_call.1} parent=1 // pred_check
      _
    $region7: #{tpu_custom_call.1} parent=1 // pred_check_branch
      %21 = sbr.rel (0) target = $region9
    $region8: #{tpu_custom_call.1} parent=1 // pred_region
      %s23 = ssub.s32 4096, 4096
      %24 = vsyncadd [#allocation6], %s23
      %s25 = sshll.u32 [#allocation5], 4
      %s26 = int_to_ptr.vmem [resolvable:$true] %s25
      %31 = dma.hbm_to_vmem [thread:$0]  %s1, 4096, %s26, [#allocation6], 128, 128, 8
    $region9: #{tpu_custom_call.1} parent=1 // pred_fallthru
      _
    // Predicated region
    $region10: #{tpu_custom_call.1} parent=1 // pred_check
      _
    $region11: #{tpu_custom_call.1} parent=1 // pred_check_branch
      %33 = sbr.rel (0) target = $region13
    $region12: #{tpu_custom_call.1} parent=1 // pred_region
      %34 = dma.done [#allocation3], 128
    $region13: #{tpu_custom_call.1} parent=1 // pred_fallthru
      _
    // Predicated region
    $region14: #{tpu_custom_call.1} parent=1 // pred_check
      _
    $region15: #{tpu_custom_call.1} parent=1 // pred_check_branch
      %36 = sbr.rel (0) target = $region17
    $region16: #{tpu_custom_call.1} parent=1 // pred_region
      %37 = dma.done [#allocation6], 4096
    $region17: #{tpu_custom_call.1} parent=1 // pred_fallthru
      _
    %p38 = scmp.eq.s32.totalorder 0, 0
    // Predicated region
    $region18: #{tpu_custom_call.1} parent=1 // pred_check
      %p39 = pneg %p38
    $region19: #{tpu_custom_call.1} parent=1 // pred_check_branch
      %41 = sbr.rel (%p39) target = $region21
    $region20: #{tpu_custom_call.1} parent=1 // pred_region
      %42 = vst [vmem:[#allocation7] sm:$0xff] 0.0
      %43 = vst [vmem:[#allocation7 + $0x8] sm:$0xff] 0.0
    $region21: #{tpu_custom_call.1} parent=1 // pred_fallthru
      _
    %v44 = vld [vmem:[#allocation2] sm:$0xff]
    %v45 = vld [vmem:[#allocation5] sm:$0xff]
    %v46 = vld [vmem:[#allocation5 + $0x8] sm:$0xff]
    %v47 = vld [vmem:[#allocation5 + $0x10] sm:$0xff]
    %v48 = vld [vmem:[#allocation5 + $0x18] sm:$0xff]
    %v49 = vld [vmem:[#allocation5 + $0x20] sm:$0xff]
    %v50 = vld [vmem:[#allocation5 + $0x28] sm:$0xff]
    %v51 = vld [vmem:[#allocation5 + $0x30] sm:$0xff]
    %v52 = vld [vmem:[#allocation5 + $0x38] sm:$0xff]
    %v53 = vld [vmem:[#allocation5 + $0x40] sm:$0xff]
    %v54 = vld [vmem:[#allocation5 + $0x48] sm:$0xff]
    %v55 = vld [vmem:[#allocation5 + $0x50] sm:$0xff]
    %v56 = vld [vmem:[#allocation5 + $0x58] sm:$0xff]
    %v57 = vld [vmem:[#allocation5 + $0x60] sm:$0xff]
    %v58 = vld [vmem:[#allocation5 + $0x68] sm:$0xff]
    %v59 = vld [vmem:[#allocation5 + $0x70] sm:$0xff]
    %v60 = vld [vmem:[#allocation5 + $0x78] sm:$0xff]
    %v61 = vld [vmem:[#allocation5 + $0x80] sm:$0xff]
    %v62 = vld [vmem:[#allocation5 + $0x88] sm:$0xff]
    %v63 = vld [vmem:[#allocation5 + $0x90] sm:$0xff]
    %v64 = vld [vmem:[#allocation5 + $0x98] sm:$0xff]
    %v65 = vld [vmem:[#allocation5 + $0xa0] sm:$0xff]
    %v66 = vld [vmem:[#allocation5 + $0xa8] sm:$0xff]
    %v67 = vld [vmem:[#allocation5 + $0xb0] sm:$0xff]
    %v68 = vld [vmem:[#allocation5 + $0xb8] sm:$0xff]
    %v69 = vld [vmem:[#allocation5 + $0xc0] sm:$0xff]
    %v70 = vld [vmem:[#allocation5 + $0xc8] sm:$0xff]
    %v71 = vld [vmem:[#allocation5 + $0xd0] sm:$0xff]
    %v72 = vld [vmem:[#allocation5 + $0xd8] sm:$0xff]
    %v73 = vld [vmem:[#allocation5 + $0xe0] sm:$0xff]
    %v74 = vld [vmem:[#allocation5 + $0xe8] sm:$0xff]
    %v75 = vld [vmem:[#allocation5 + $0xf0] sm:$0xff]
    %v76 = vld [vmem:[#allocation5 + $0xf8] sm:$0xff]
    %v77 = vld [vmem:[#allocation7] sm:$0xff]
    %v78 = vld [vmem:[#allocation7 + $0x8] sm:$0xff]
    %79 = vmatprep.subr.mxu0 0.0
    %80 = vmatpush1.xpose.msra.mxu0 %v45
    %81 = vmatprep.subr.mxu0 0.0
    %82 = vmatpush1.xpose.msra.mxu0 %v46
    %83 = vmatprep.subr.mxu0 0.0
    %84 = vmatpush1.xpose.msra.mxu0 %v47
    %85 = vmatprep.subr.mxu0 0.0
    %86 = vmatpush1.xpose.msra.mxu0 %v48
    %87 = vmatprep.subr.mxu0 0.0
    %88 = vmatpush1.xpose.msra.mxu0 %v49
    %89 = vmatprep.subr.mxu0 0.0
    %90 = vmatpush1.xpose.msra.mxu0 %v50
    %91 = vmatprep.subr.mxu0 0.0
    %92 = vmatpush1.xpose.msra.mxu0 %v51
    %93 = vmatprep.subr.mxu0 0.0
    %94 = vmatpush1.xpose.msra.mxu0 %v52
    %95 = vmatprep.subr.mxu0 0.0
    %96 = vmatpush1.xpose.msra.mxu0 %v53
    %97 = vmatprep.subr.mxu0 0.0
    %98 = vmatpush1.xpose.msra.mxu0 %v54
    %99 = vmatprep.subr.mxu0 0.0
    %100 = vmatpush1.xpose.msra.mxu0 %v55
    %101 = vmatprep.subr.mxu0 0.0
    %102 = vmatpush1.xpose.msra.mxu0 %v56
    %103 = vmatprep.subr.mxu0 0.0
    %104 = vmatpush1.xpose.msra.mxu0 %v57
    %105 = vmatprep.subr.mxu0 0.0
    %106 = vmatpush1.xpose.msra.mxu0 %v58
    %107 = vmatprep.subr.mxu0 0.0
    %108 = vmatpush1.xpose.msra.mxu0 %v59
    %109 = vmatprep.subr.mxu0 0.0
    %110 = vmatpush1.xpose.msra.mxu0 %v60
    %111 = vmatprep.subr.mxu0 0.0
    %112 = vmatpush1.xpose.msra.mxu0 %v61
    %113 = vmatprep.subr.mxu0 0.0
    %114 = vmatpush1.xpose.msra.mxu0 %v62
    %115 = vmatprep.subr.mxu0 0.0
    %116 = vmatpush1.xpose.msra.mxu0 %v63
    %117 = vmatprep.subr.mxu0 0.0
    %118 = vmatpush1.xpose.msra.mxu0 %v64
    %119 = vmatprep.subr.mxu0 0.0
    %120 = vmatpush1.xpose.msra.mxu0 %v65
    %121 = vmatprep.subr.mxu0 0.0
    %122 = vmatpush1.xpose.msra.mxu0 %v66
    %123 = vmatprep.subr.mxu0 0.0
    %124 = vmatpush1.xpose.msra.mxu0 %v67
    %125 = vmatprep.subr.mxu0 0.0
    %126 = vmatpush1.xpose.msra.mxu0 %v68
    %127 = vmatprep.subr.mxu0 0.0
    %128 = vmatpush1.xpose.msra.mxu0 %v69
    %129 = vmatprep.subr.mxu0 0.0
    %130 = vmatpush1.xpose.msra.mxu0 %v70
    %131 = vmatprep.subr.mxu0 0.0
    %132 = vmatpush1.xpose.msra.mxu0 %v71
    %133 = vmatprep.subr.mxu0 0.0
    %134 = vmatpush1.xpose.msra.mxu0 %v72
    %135 = vmatprep.subr.mxu0 0.0
    %136 = vmatpush1.xpose.msra.mxu0 %v73
    %137 = vmatprep.subr.mxu0 0.0
    %138 = vmatpush1.xpose.msra.mxu0 %v74
    %139 = vmatprep.subr.mxu0 0.0
    %140 = vmatpush1.xpose.msra.mxu0 %v75
    %141 = vmatprep.subr.mxu0 0.0
    %142 = vmatpush1.xpose.msra.mxu0 %v76
    %143 = vmatprep.mubr.f32.mxu0 0.0
    %144 = vmatmul.mubr.f32.gmra.mrb[0].mxu0 %v44
    %v145 = vpop.f32.mrb[0].mxu0
    %v146 = vadd.f32 0.0, %v145
    %v147 = vpop.f32.mrb[0].mxu0
    %v148 = vadd.f32 0.0, %v147
    %149 = vdwg.mxu0
    %v150 = vadd.f32 %v77, %v146
    %v151 = vadd.f32 %v78, %v148
    %152 = vst [vmem:[#allocation7] sm:$0xff] %v150
    %153 = vst [vmem:[#allocation7 + $0x8] sm:$0xff] %v151
    // Predicated region
    $region22: #{tpu_custom_call.1} parent=1 // pred_check
      _
    $region23: #{tpu_custom_call.1} parent=1 // pred_check_branch
      %155 = sbr.rel (0) target = $region25
    $region24: #{tpu_custom_call.1} parent=1 // pred_region
      %s157 = ssub.s32 256, 256
      %158 = vsyncadd [#allocation4], %s157
      %s160 = sshll.u32 [#allocation7], 4
      %s161 = int_to_ptr.vmem [resolvable:$true] %s160
      %163 = dma.vmem_to_hbm [thread:$0]  %s161, 256, %s2, [#allocation4]
    $region25: #{tpu_custom_call.1} parent=1 // pred_fallthru
      _
    // Predicated region
    $region26: #{tpu_custom_call.1} parent=1 // pred_check
      _
    $region27: #{tpu_custom_call.1} parent=1 // pred_check_branch
      %165 = sbr.rel (0) target = $region29
    $region28: #{tpu_custom_call.1} parent=1 // pred_region
      %166 = dma.done [#allocation4], 256
    $region29: #{tpu_custom_call.1} parent=1 // pred_fallthru
      _
    %167 = vsyncpa [#allocation3], 1
    %168 = vsyncpa [#allocation6], 1
    %169 = vsyncpa [#allocation4], 1

</llo_original>
